<compile_context>
chip_gen: v7x
topology: tpu7x:2x2x1
jax: 0.10.0
libtpu: 0.0.40
codegen_flags: <defaults>
</compile_context>

<pallas_src>
import functools

import jax
import jax.numpy as jnp
from jax import lax
from jax.experimental import pallas as pl
from jax.experimental.pallas import tpu as pltpu


def _round_up(n, m):
    return ((n + m - 1) // m) * m


def _cdiv(a, b):
    return (a + b - 1) // b


def _vqvae_kernel(num_valid, tile_b,
                  x_ref, w1_ref, b1_ref, w2_ref, b2_ref,
                  e_ref, esq_ref,
                  w3_ref, b3_ref, w4_ref, b4_ref,
                  xrec_ref, z_ref, sqd_ref, cnt_ref):
    f32 = jnp.float32
    bf16 = jnp.bfloat16

    x = x_ref[...]                                            # (TB, Din_p) f32, padded lanes = 0

    # ---- Encoder: relu(x @ W1 + b1) @ W2 + b2  (bf16 MXU inputs, f32 accumulate) ----
    h = jnp.dot(x.astype(bf16), w1_ref[...],
                preferred_element_type=f32) + b1_ref[...]
    h = jnp.maximum(h, 0.0)
    z = jnp.dot(h.astype(bf16), w2_ref[...],
                preferred_element_type=f32) + b2_ref[...]     # (TB, Demb_p) f32, padded lanes = 0
    z_ref[...] = z

    # ---- Vector quantizer (f32: keeps torch.argmin tie-breaking exact) ----
    E = e_ref[...]                                            # (K_p, Demb_p) f32
    Kp = E.shape[0]
    TB = z.shape[0]

    z_sq = jnp.sum(z * z, axis=1, keepdims=True)              # (TB, 1)
    # z @ E^T via dot_general on the resident E block (no separate E_T stream).
    ze = lax.dot_general(z, E, (((1,), (1,)), ((), ())),
                         preferred_element_type=f32)          # (TB, K_p)
    distances = z_sq + esq_ref[...] - 2.0 * ze                # padded codes: ||e||^2 = +inf

    # argmin with first-index tie-breaking (matches torch.argmin)
    min_d = jnp.min(distances, axis=1, keepdims=True)
    iota_k = lax.broadcasted_iota(jnp.int32, (TB, Kp), 1)
    idx = jnp.min(jnp.where(distances == min_d, iota_k, Kp), axis=1, keepdims=True)
    encodings = (iota_k == idx).astype(f32)                   # (TB, K_p) one-hot

    # quantized = one_hot @ E  (f32: values are literal codebook rows)
    quantized = jnp.dot(encodings, E, preferred_element_type=f32)   # (TB, Demb_p)

    # mask padded batch rows out of the global reductions
    row = lax.broadcasted_iota(jnp.int32, (TB, 1), 0) + pl.program_id(0) * tile_b
    valid = (row < num_valid).astype(f32)                     # (TB, 1)

    diff = (quantized - z) * valid
    sqd_scalar = jnp.sum(diff * diff)                         # full scalar reduction in-kernel
    sqd_ref[...] = jnp.broadcast_to(sqd_scalar, (1, 1, 128))  # lane-dense partial-sum block
    cnt_ref[...] = jnp.sum(encodings * valid, axis=0, keepdims=True)[None]   # (1, 1, K_p)

    # ---- Decoder: relu(q @ W3 + b3) @ W4 + b4  (forward value of the STE is `quantized`) ----
    h2 = jnp.dot(quantized.astype(bf16), w3_ref[...],
                 preferred_element_type=f32) + b3_ref[...]
    h2 = jnp.maximum(h2, 0.0)
    xrec_ref[...] = jnp.dot(h2.astype(bf16), w4_ref[...],
                            preferred_element_type=f32) + b4_ref[...]


def prepare_params(params):
    """One-time parameter prep: pad feature dims to multiples of 128, cast dense-layer
    weights to bf16, precompute ||e||^2 (+inf on padded codebook rows)."""
    w1, b1, w2, b2, E, w3, b3, w4, b4 = params
    Din, H = w1.shape
    K, Demb = E.shape
    Din_p, H_p, Demb_p, K_p = (_round_up(d, 128) for d in (Din, H, Demb, K))

    def pad2(a, r, c):
        return jnp.pad(a, ((0, r - a.shape[0]), (0, c - a.shape[1])))

    bf16 = jnp.bfloat16
    w1b = pad2(w1, Din_p, H_p).astype(bf16)
    b1p = pad2(b1, 1, H_p)
    w2b = pad2(w2, H_p, Demb_p).astype(bf16)
    b2p = pad2(b2, 1, Demb_p)
    E_p = pad2(E, K_p, Demb_p)                                  # f32; padded rows are zero
    e_sq = jnp.sum(E * E, axis=1)
    e_sq = jnp.pad(e_sq, (0, K_p - K), constant_values=float("inf"))[None, :]
    w3b = pad2(w3, Demb_p, H_p).astype(bf16)
    b3p = pad2(b3, 1, H_p)
    w4b = pad2(w4, H_p, Din_p).astype(bf16)
    b4p = pad2(b4, 1, Din_p)

    dims = dict(Din=Din, H=H, Demb=Demb, K=K,
                Din_p=Din_p, H_p=H_p, Demb_p=Demb_p, K_p=K_p)
    prepared = (w1b, b1p, w2b, b2p, E_p, e_sq, w3b, b3p, w4b, b4p)
    return prepared, dims


def vqvae_forward(x, prepared, dims, *, commitment_cost):
    """x: (B, input_dim) float32. `prepared`, `dims` from prepare_params().
    Returns (x_recon, vq_loss, perplexity, z)."""
    B, Din = x.shape
    w1b, b1p, w2b, b2p, E_p, e_sq, w3b, b3p, w4b, b4p = prepared
    Din_p, H_p, Demb_p, K_p = dims["Din_p"], dims["H_p"], dims["Demb_p"], dims["K_p"]
    Demb, K = dims["Demb"], dims["K"]
    assert Din == dims["Din"]

    # ---- generation-aware VMEM budget (v7x: 64 MiB/TC; v5e/v6e: 128 MiB) ----
    try:
        info = pltpu.get_tpu_info()
        vmem_cap = int(getattr(info, "vmem_capacity_bytes", 64 << 20))
    except Exception:
        vmem_cap = 64 << 20
    budget = int(vmem_cap * 3 // 4)

    # ---- batch tiling: minimize padding, >=2 tiles when B allows (v7x megacore) ----
    tb_cap = 2048 if vmem_cap >= (96 << 20) else 1024
    n_t = max(1, _cdiv(B, tb_cap))
    if n_t == 1 and B >= 16:
        n_t = 2
    TB = _round_up(_cdiv(B, n_t), 8)
    num_tiles = _cdiv(B, TB)
    B_pad = num_tiles * TB
    x_p = jnp.pad(x, ((0, B_pad - B), (0, Din_p - Din)))

    # rough VMEM requirement: resident params (double-buffered by BlockSpec) + tiles + temps
    resident = ((Din_p * H_p + H_p * Demb_p + Demb_p * H_p + H_p * Din_p) * 2   # bf16 weights
                + (2 * H_p + Demb_p + Din_p) * 4                                 # biases
                + (K_p * Demb_p + K_p) * 4)                                      # E, ||e||^2
    per_tile = 2 * (2 * TB * Din_p + 2 * TB * Demb_p + 128 + K_p) * 4            # dbl-buffered I/O
    interm = (2 * TB * H_p + 2 * TB * Demb_p + 3 * TB * K_p) * 4
    vmem_limit = int(min(budget, max(8 << 20, 2 * resident + per_tile + interm + (4 << 20))))

    flops = 2 * B_pad * (Din_p * H_p + H_p * Demb_p + Demb_p * K_p
                         + K_p * Demb_p + Demb_p * H_p + H_p * Din_p)
    bytes_accessed = int(
        x_p.size * 4
        + sum(int(a.size) * a.dtype.itemsize
              for a in (w1b, b1p, w2b, b2p, E_p, e_sq, w3b, b3p, w4b, b4p))
        + (B_pad * Din_p + B_pad * Demb_p + num_tiles * (128 + K_p)) * 4)

    kernel = functools.partial(_vqvae_kernel, int(B), int(TB))

    def tile_map(i):        # batch-tiled arrays
        return (i, 0)

    def resident_map(i):    # weights / codebook stay on the same block every step
        return (0, 0)

    x_recon, z, sqd, cnt = pl.pallas_call(
        kernel,
        grid=(num_tiles,),
        in_specs=[
            pl.BlockSpec((TB, Din_p), tile_map),       # x
            pl.BlockSpec((Din_p, H_p), resident_map),  # W1 (bf16)
            pl.BlockSpec((1, H_p), resident_map),      # b1
            pl.BlockSpec((H_p, Demb_p), resident_map), # W2 (bf16)
            pl.BlockSpec((1, Demb_p), resident_map),   # b2
            pl.BlockSpec((K_p, Demb_p), resident_map), # E
            pl.BlockSpec((1, K_p), resident_map),      # ||e||^2 (+inf on padded rows)
            pl.BlockSpec((Demb_p, H_p), resident_map), # W3 (bf16)
            pl.BlockSpec((1, H_p), resident_map),      # b3
            pl.BlockSpec((H_p, Din_p), resident_map),  # W4 (bf16)
            pl.BlockSpec((1, Din_p), resident_map),    # b4
        ],
        out_specs=(
            pl.BlockSpec((TB, Din_p), tile_map),                 # x_recon (lane-dense)
            pl.BlockSpec((TB, Demb_p), tile_map),                # z       (lane-dense)
            pl.BlockSpec((1, 1, 128), lambda i: (i, 0, 0)),      # per-tile sum((q-z)^2)
            pl.BlockSpec((1, 1, K_p), lambda i: (i, 0, 0)),      # per-tile code counts
        ),
        out_shape=(
            jax.ShapeDtypeStruct((B_pad, Din_p), jnp.float32),
            jax.ShapeDtypeStruct((B_pad, Demb_p), jnp.float32),
            jax.ShapeDtypeStruct((num_tiles, 1, 128), jnp.float32),
            jax.ShapeDtypeStruct((num_tiles, 1, K_p), jnp.float32),
        ),
        compiler_params=pltpu.CompilerParams(
            dimension_semantics=("parallel",),
            vmem_limit_bytes=vmem_limit,
        ),
        cost_estimate=pl.CostEstimate(
            flops=int(flops), transcendentals=0, bytes_accessed=bytes_accessed),
    )(x_p, w1b, b1p, w2b, b2p, E_p, e_sq, w3b, b3p, w4b, b4p)

    x_recon = x_recon[:B, :Din]
    z = z[:B, :Demb]

    # finalize loss / perplexity from per-tile partial sums
    total_sqd = jnp.sum(sqd[:, 0, 0])
    mse = total_sqd / (B * Demb)
    vq_loss = (1.0 + commitment_cost) * mse
    avg_probs = jnp.sum(cnt, axis=(0, 1))[:K] / B               # (K,)
    perplexity = jnp.exp(-jnp.sum(avg_probs * jnp.log(avg_probs + 1e-10)))
    return x_recon, vq_loss, perplexity, z


def init_params(key, input_dim, hidden_dim, embedding_dim, num_embeddings):
    """Deterministic init mimicking nn.Linear / nn.Embedding(uniform(-1/K, 1/K)).
    Linear weights are stored pre-transposed as (in_features, out_features)."""
    ks = jax.random.split(key, 9)

    def linear(kw, kb, fan_in, fan_out):
        bound = 1.0 / jnp.sqrt(fan_in)
        w = jax.random.uniform(kw, (fan_in, fan_out), jnp.float32, -bound, bound)
        b = jax.random.uniform(kb, (1, fan_out), jnp.float32, -bound, bound)
        return w, b

    w1, b1 = linear(ks[0], ks[1], input_dim, hidden_dim)      # encoder fc1
    w2, b2 = linear(ks[2], ks[3], hidden_dim, embedding_dim)  # encoder fc2
    E = jax.random.uniform(ks[4], (num_embeddings, embedding_dim), jnp.float32,
                           -1.0 / num_embeddings, 1.0 / num_embeddings)
    w3, b3 = linear(ks[5], ks[6], embedding_dim, hidden_dim)  # decoder fc1
    w4, b4 = linear(ks[7], ks[8], hidden_dim, input_dim)      # decoder fc2
    return (w1, b1, w2, b2, E, w3, b3, w4, b4)


def vqvae_reference(x, params, *, commitment_cost):
    """Pure-JAX reference with the same precision policy as the kernel
    (bf16 MXU inputs for the dense layers, f32 vector-quantizer)."""
    w1, b1, w2, b2, E, w3, b3, w4, b4 = params
    f32, bf16 = jnp.float32, jnp.bfloat16

    def dot16(a, w):
        return jnp.dot(a.astype(bf16), w.astype(bf16), preferred_element_type=f32)

    z = dot16(jnp.maximum(dot16(x, w1) + b1, 0.0), w2) + b2
    d = (jnp.sum(z ** 2, axis=1, keepdims=True) + jnp.sum(E ** 2, axis=1)
         - 2.0 * jnp.dot(z, E.T, preferred_element_type=f32))
    idx = jnp.argmin(d, axis=1)
    enc = jax.nn.one_hot(idx, E.shape[0], dtype=f32)
    q = E[idx]
    mse = jnp.mean((q - z) ** 2)
    loss = (1.0 + commitment_cost) * mse
    avg = jnp.mean(enc, axis=0)
    perp = jnp.exp(-jnp.sum(avg * jnp.log(avg + 1e-10)))
    xr = dot16(jnp.maximum(dot16(q, w3) + b3, 0.0), w4) + b4
    return xr, loss, perp, z


# TODO(synk): the straight-through estimator (z + (q - z).detach()) only matters for
# gradients; this kernel implements the forward value only.

if __name__ == "__main__":
    # Small shapes consistent with the Linear-based forward of the module.
    B, INPUT_DIM, HIDDEN_DIM, EMB_DIM, NUM_EMB = 8, 16, 32, 8, 16
    COMMITMENT_COST = 0.25

    key = jax.random.PRNGKey(0)
    k_x, k_p = jax.random.split(key)
    x = jax.random.normal(k_x, (B, INPUT_DIM), jnp.float32)
    params = init_params(k_p, INPUT_DIM, HIDDEN_DIM, EMB_DIM, NUM_EMB)

    # one-time parameter prep (padding / bf16 / ||e||^2), reused across forward calls
    prepared, dims = prepare_params(params)

    x_recon, vq_loss, perplexity, z = vqvae_forward(
        x, prepared, dims, commitment_cost=COMMITMENT_COST)
    jax.block_until_ready((x_recon, vq_loss, perplexity, z))

    # sanity check against a same-precision pure-JAX reference
    xr_ref, ref_loss, ref_perp, ref_z = vqvae_reference(
        x, params, commitment_cost=COMMITMENT_COST)
    assert jnp.allclose(z, ref_z, atol=1e-3, rtol=1e-3)
    assert jnp.allclose(x_recon, xr_ref, atol=1e-3, rtol=1e-3)
    assert jnp.allclose(vq_loss, ref_loss, atol=1e-4, rtol=1e-3)
    assert jnp.allclose(perplexity, ref_perp, atol=1e-3, rtol=1e-3)

    print("KERNEL_OK")
</pallas_src>

<mosaic_0001>
module attributes {stable_mosaic.version = 11 : i64} {
  func.func @_vqvae_kernel(%arg0: i32, %arg1: memref<8x128xf32, #tpu.memory_space<vmem>>, %arg2: memref<128x128xbf16, #tpu.memory_space<vmem>>, %arg3: memref<1x128xf32, #tpu.memory_space<vmem>>, %arg4: memref<128x128xbf16, #tpu.memory_space<vmem>>, %arg5: memref<1x128xf32, #tpu.memory_space<vmem>>, %arg6: memref<128x128xf32, #tpu.memory_space<vmem>>, %arg7: memref<1x128xf32, #tpu.memory_space<vmem>>, %arg8: memref<128x128xbf16, #tpu.memory_space<vmem>>, %arg9: memref<1x128xf32, #tpu.memory_space<vmem>>, %arg10: memref<128x128xbf16, #tpu.memory_space<vmem>>, %arg11: memref<1x128xf32, #tpu.memory_space<vmem>>, %arg12: memref<8x128xf32, #tpu.memory_space<vmem>>, %arg13: memref<8x128xf32, #tpu.memory_space<vmem>>, %arg14: memref<1x1x128xf32, #tpu.memory_space<vmem>>, %arg15: memref<1x1x128xf32, #tpu.memory_space<vmem>>) attributes {dimension_semantics = [#tpu.dimension_semantics<parallel>], iteration_bounds = array<i64: 1>, scalar_prefetch = 0 : i64, scratch_operands = 0 : i64, tpu.core_type = #tpu.core_type<tc>, window_params = [{transform_indices = @transform_0, window_bounds = array<i64: 8, 128>}, {pipeline_mode = #tpu.pipeline_mode<synchronous>, transform_indices = @transform_1, window_bounds = array<i64: 128, 128>}, {pipeline_mode = #tpu.pipeline_mode<synchronous>, transform_indices = @transform_2, window_bounds = array<i64: 1, 128>}, {pipeline_mode = #tpu.pipeline_mode<synchronous>, transform_indices = @transform_3, window_bounds = array<i64: 128, 128>}, {pipeline_mode = #tpu.pipeline_mode<synchronous>, transform_indices = @transform_4, window_bounds = array<i64: 1, 128>}, {pipeline_mode = #tpu.pipeline_mode<synchronous>, transform_indices = @transform_5, window_bounds = array<i64: 128, 128>}, {pipeline_mode = #tpu.pipeline_mode<synchronous>, transform_indices = @transform_6, window_bounds = array<i64: 1, 128>}, {pipeline_mode = #tpu.pipeline_mode<synchronous>, transform_indices = @transform_7, window_bounds = array<i64: 128, 128>}, {pipeline_mode = #tpu.pipeline_mode<synchronous>, transform_indices = @transform_8, window_bounds = array<i64: 1, 128>}, {pipeline_mode = #tpu.pipeline_mode<synchronous>, transform_indices = @transform_9, window_bounds = array<i64: 128, 128>}, {pipeline_mode = #tpu.pipeline_mode<synchronous>, transform_indices = @transform_10, window_bounds = array<i64: 1, 128>}, {transform_indices = @transform_11, window_bounds = array<i64: 8, 128>}, {transform_indices = @transform_12, window_bounds = array<i64: 8, 128>}, {transform_indices = @transform_13, window_bounds = array<i64: 1, 1, 128>}, {transform_indices = @transform_14, window_bounds = array<i64: 1, 1, 128>}]} {
    %c0 = arith.constant 0 : index
    %c0_0 = arith.constant 0 : index
    %0 = vector.load %arg1[%c0, %c0_0] : memref<8x128xf32, #tpu.memory_space<vmem>>, vector<8x128xf32>
    %1 = arith.truncf %0 : vector<8x128xf32> to vector<8x128xbf16>
    %c0_1 = arith.constant 0 : index
    %c0_2 = arith.constant 0 : index
    %2 = vector.load %arg2[%c0_1, %c0_2] : memref<128x128xbf16, #tpu.memory_space<vmem>>, vector<128x128xbf16>
    %cst = arith.constant dense<0.000000e+00> : vector<8x128xf32>
    %3 = tpu.matmul %1, %2, %cst {dimension_numbers = #tpu.dot_dimension_numbers<[1], [0], [0], [1], [0, 0, 1, 1], [], []>} : vector<8x128xbf16>, vector<128x128xbf16>, vector<8x128xf32> -> vector<8x128xf32>
    %c0_3 = arith.constant 0 : index
    %c0_4 = arith.constant 0 : index
    %4 = vector.load %arg3[%c0_3, %c0_4] : memref<1x128xf32, #tpu.memory_space<vmem>>, vector<1x128xf32>
    %5 = vector.broadcast %4 : vector<1x128xf32> to vector<8x128xf32>
    %6 = arith.addf %3, %5 : vector<8x128xf32>
    %cst_5 = arith.constant 0.000000e+00 : f32
    %7 = vector.broadcast %cst_5 : f32 to vector<8x128xf32>
    %8 = arith.maximumf %6, %7 : vector<8x128xf32>
    %9 = arith.truncf %8 : vector<8x128xf32> to vector<8x128xbf16>
    %c0_6 = arith.constant 0 : index
    %c0_7 = arith.constant 0 : index
    %10 = vector.load %arg4[%c0_6, %c0_7] : memref<128x128xbf16, #tpu.memory_space<vmem>>, vector<128x128xbf16>
    %cst_8 = arith.constant dense<0.000000e+00> : vector<8x128xf32>
    %11 = tpu.matmul %9, %10, %cst_8 {dimension_numbers = #tpu.dot_dimension_numbers<[1], [0], [0], [1], [0, 0, 1, 1], [], []>} : vector<8x128xbf16>, vector<128x128xbf16>, vector<8x128xf32> -> vector<8x128xf32>
    %c0_9 = arith.constant 0 : index
    %c0_10 = arith.constant 0 : index
    %12 = vector.load %arg5[%c0_9, %c0_10] : memref<1x128xf32, #tpu.memory_space<vmem>>, vector<1x128xf32>
    %13 = vector.broadcast %12 : vector<1x128xf32> to vector<8x128xf32>
    %14 = arith.addf %11, %13 : vector<8x128xf32>
    %c0_11 = arith.constant 0 : index
    %c0_12 = arith.constant 0 : index
    %15 = vector.load %arg13[%c0_11, %c0_12] : memref<8x128xf32, #tpu.memory_space<vmem>>, vector<8x128xf32>
    tpu.vector_store %arg13[%c0_11, %c0_12], %14 {strides = array<i32>} : memref<8x128xf32, #tpu.memory_space<vmem>>, vector<8x128xf32>,
    %c0_13 = arith.constant 0 : index
    %c0_14 = arith.constant 0 : index
    %16 = vector.load %arg6[%c0_13, %c0_14] : memref<128x128xf32, #tpu.memory_space<vmem>>, vector<128x128xf32>
    %17 = arith.mulf %14, %14 : vector<8x128xf32>
    %cst_15 = arith.constant dense<0.000000e+00> : vector<8xf32>
    %18 = vector.multi_reduction <add>, %17, %cst_15 [1] : vector<8x128xf32> to vector<8xf32>
    %19 = vector.shape_cast %18 : vector<8xf32> to vector<8x1xf32>
    %cst_16 = arith.constant dense<0.000000e+00> : vector<8x128xf32>
    %20 = tpu.matmul %14, %16, %cst_16 {dimension_numbers = #tpu.dot_dimension_numbers<[1], [1], [0], [0], [0, 0, 1, 0], [], []>} : vector<8x128xf32>, vector<128x128xf32>, vector<8x128xf32> -> vector<8x128xf32>
    %c0_17 = arith.constant 0 : index
    %c0_18 = arith.constant 0 : index
    %21 = vector.load %arg7[%c0_17, %c0_18] : memref<1x128xf32, #tpu.memory_space<vmem>>, vector<1x128xf32>
    %22 = vector.broadcast %19 : vector<8x1xf32> to vector<8x128xf32>
    %23 = vector.broadcast %21 : vector<1x128xf32> to vector<8x128xf32>
    %24 = arith.addf %22, %23 : vector<8x128xf32>
    %cst_19 = arith.constant 2.000000e+00 : f32
    %25 = vector.broadcast %cst_19 : f32 to vector<8x128xf32>
    %26 = arith.mulf %25, %20 : vector<8x128xf32>
    %27 = arith.subf %24, %26 : vector<8x128xf32>
    %cst_20 = arith.constant dense<0x7F800000> : vector<8xf32>
    %28 = vector.multi_reduction <minimumf>, %27, %cst_20 [1] : vector<8x128xf32> to vector<8xf32>
    %29 = vector.shape_cast %28 : vector<8xf32> to vector<8x1xf32>
    %30 = tpu.iota {dimensions = array<i32: 1>} : vector<8x128xi32>
    %31 = vector.broadcast %29 : vector<8x1xf32> to vector<8x128xf32>
    %32 = arith.cmpf oeq, %27, %31 : vector<8x128xf32>
    %c128_i32 = arith.constant 128 : i32
    %33 = vector.broadcast %c128_i32 : i32 to vector<8x128xi32>
    %34 = arith.select %32, %30, %33 : vector<8x128xi1>, vector<8x128xi32>
    %cst_21 = arith.constant dense<2147483647> : vector<8xi32>
    %35 = vector.multi_reduction <minsi>, %34, %cst_21 [1] : vector<8x128xi32> to vector<8xi32>
    %36 = vector.shape_cast %35 : vector<8xi32> to vector<8x1xi32>
    %37 = vector.broadcast %36 : vector<8x1xi32> to vector<8x128xi32>
    %38 = arith.cmpi eq, %30, %37 : vector<8x128xi32>
    %39 = arith.extui %38 : vector<8x128xi1> to vector<8x128xi32>
    %40 = arith.sitofp %39 : vector<8x128xi32> to vector<8x128xf32>
    %cst_22 = arith.constant dense<0.000000e+00> : vector<8x128xf32>
    %41 = tpu.matmul %40, %16, %cst_22 {dimension_numbers = #tpu.dot_dimension_numbers<[1], [0], [0], [1], [0, 0, 1, 1], [], []>} : vector<8x128xf32>, vector<128x128xf32>, vector<8x128xf32> -> vector<8x128xf32>
    %42 = tpu.iota {dimensions = array<i32: 0>} : vector<8x1xi32>
    %c8_i32 = arith.constant 8 : i32
    %43 = arith.muli %arg0, %c8_i32 : i32
    %44 = vector.broadcast %43 : i32 to vector<8x1xi32>
    %45 = arith.addi %42, %44 : vector<8x1xi32>
    %c8_i32_23 = arith.constant 8 : i32
    %46 = vector.broadcast %c8_i32_23 : i32 to vector<8x1xi32>
    %47 = arith.cmpi slt, %45, %46 : vector<8x1xi32>
    %48 = arith.extui %47 : vector<8x1xi1> to vector<8x1xi32>
    %49 = arith.sitofp %48 : vector<8x1xi32> to vector<8x1xf32>
    %50 = arith.subf %41, %14 : vector<8x128xf32>
    %51 = vector.broadcast %49 : vector<8x1xf32> to vector<8x128xf32>
    %52 = arith.mulf %50, %51 : vector<8x128xf32>
    %53 = arith.mulf %52, %52 : vector<8x128xf32>
    %54 = vector.shape_cast %53 : vector<8x128xf32> to vector<1x8x128xf32>
    %cst_24 = arith.constant dense<0.000000e+00> : vector<1xf32>
    %55 = vector.multi_reduction <add>, %54, %cst_24 [1, 2] : vector<1x8x128xf32> to vector<1xf32>
    %56 = vector.shape_cast %55 : vector<1xf32> to vector<1x1x1xf32>
    %57 = vector.extract %56[0, 0, 0] : f32 from vector<1x1x1xf32>
    %58 = vector.broadcast %57 : f32 to vector<1x1x128xf32>
    %c0_25 = arith.constant 0 : index
    %c0_26 = arith.constant 0 : index
    %c0_27 = arith.constant 0 : index
    %59 = vector.load %arg14[%c0_25, %c0_26, %c0_27] : memref<1x1x128xf32, #tpu.memory_space<vmem>>, vector<1x1x128xf32>
    tpu.vector_store %arg14[%c0_25, %c0_26, %c0_27], %58 {strides = array<i32>} : memref<1x1x128xf32, #tpu.memory_space<vmem>>, vector<1x1x128xf32>,
    %60 = vector.broadcast %49 : vector<8x1xf32> to vector<8x128xf32>
    %61 = arith.mulf %40, %60 : vector<8x128xf32>
    %cst_28 = arith.constant dense<0.000000e+00> : vector<128xf32>
    %62 = vector.multi_reduction <add>, %61, %cst_28 [0] : vector<8x128xf32> to vector<128xf32>
    %63 = vector.shape_cast %62 : vector<128xf32> to vector<1x128xf32>
    %64 = vector.shape_cast %63 : vector<1x128xf32> to vector<1x1x128xf32>
    %c0_29 = arith.constant 0 : index
    %c0_30 = arith.constant 0 : index
    %c0_31 = arith.constant 0 : index
    %65 = vector.load %arg15[%c0_29, %c0_30, %c0_31] : memref<1x1x128xf32, #tpu.memory_space<vmem>>, vector<1x1x128xf32>
    tpu.vector_store %arg15[%c0_29, %c0_30, %c0_31], %64 {strides = array<i32>} : memref<1x1x128xf32, #tpu.memory_space<vmem>>, vector<1x1x128xf32>,
    %66 = arith.truncf %41 : vector<8x128xf32> to vector<8x128xbf16>
    %c0_32 = arith.constant 0 : index
    %c0_33 = arith.constant 0 : index
    %67 = vector.load %arg8[%c0_32, %c0_33] : memref<128x128xbf16, #tpu.memory_space<vmem>>, vector<128x128xbf16>
    %cst_34 = arith.constant dense<0.000000e+00> : vector<8x128xf32>
    %68 = tpu.matmul %66, %67, %cst_34 {dimension_numbers = #tpu.dot_dimension_numbers<[1], [0], [0], [1], [0, 0, 1, 1], [], []>} : vector<8x128xbf16>, vector<128x128xbf16>, vector<8x128xf32> -> vector<8x128xf32>
    %c0_35 = arith.constant 0 : index
    %c0_36 = arith.constant 0 : index
    %69 = vector.load %arg9[%c0_35, %c0_36] : memref<1x128xf32, #tpu.memory_space<vmem>>, vector<1x128xf32>
    %70 = vector.broadcast %69 : vector<1x128xf32> to vector<8x128xf32>
    %71 = arith.addf %68, %70 : vector<8x128xf32>
    %cst_37 = arith.constant 0.000000e+00 : f32
    %72 = vector.broadcast %cst_37 : f32 to vector<8x128xf32>
    %73 = arith.maximumf %71, %72 : vector<8x128xf32>
    %74 = arith.truncf %73 : vector<8x128xf32> to vector<8x128xbf16>
    %c0_38 = arith.constant 0 : index
    %c0_39 = arith.constant 0 : index
    %75 = vector.load %arg10[%c0_38, %c0_39] : memref<128x128xbf16, #tpu.memory_space<vmem>>, vector<128x128xbf16>
    %cst_40 = arith.constant dense<0.000000e+00> : vector<8x128xf32>
    %76 = tpu.matmul %74, %75, %cst_40 {dimension_numbers = #tpu.dot_dimension_numbers<[1], [0], [0], [1], [0, 0, 1, 1], [], []>} : vector<8x128xbf16>, vector<128x128xbf16>, vector<8x128xf32> -> vector<8x128xf32>
    %c0_41 = arith.constant 0 : index
    %c0_42 = arith.constant 0 : index
    %77 = vector.load %arg11[%c0_41, %c0_42] : memref<1x128xf32, #tpu.memory_space<vmem>>, vector<1x128xf32>
    %78 = vector.broadcast %77 : vector<1x128xf32> to vector<8x128xf32>
    %79 = arith.addf %76, %78 : vector<8x128xf32>
    %c0_43 = arith.constant 0 : index
    %c0_44 = arith.constant 0 : index
    %80 = vector.load %arg12[%c0_43, %c0_44] : memref<8x128xf32, #tpu.memory_space<vmem>>, vector<8x128xf32>
    tpu.vector_store %arg12[%c0_43, %c0_44], %79 {strides = array<i32>} : memref<8x128xf32, #tpu.memory_space<vmem>>, vector<8x128xf32>,
    return
  }
  func.func @transform_0(%arg0: i32) -> (i32, i32) {
    %c0_i32 = arith.constant 0 : i32
    %c0_i32_0 = arith.constant 0 : i32
    return %arg0, %c0_i32 : i32, i32
  }
  func.func @transform_1(%arg0: i32) -> (i32, i32) {
    %c0_i32 = arith.constant 0 : i32
    %c0_i32_0 = arith.constant 0 : i32
    %c0_i32_1 = arith.constant 0 : i32
    return %c0_i32, %c0_i32_0 : i32, i32
  }
  func.func @transform_2(%arg0: i32) -> (i32, i32) {
    %c0_i32 = arith.constant 0 : i32
    %c0_i32_0 = arith.constant 0 : i32
    %c0_i32_1 = arith.constant 0 : i32
    return %c0_i32, %c0_i32_0 : i32, i32
  }
  func.func @transform_3(%arg0: i32) -> (i32, i32) {
    %c0_i32 = arith.constant 0 : i32
    %c0_i32_0 = arith.constant 0 : i32
    %c0_i32_1 = arith.constant 0 : i32
    return %c0_i32, %c0_i32_0 : i32, i32
  }
  func.func @transform_4(%arg0: i32) -> (i32, i32) {
    %c0_i32 = arith.constant 0 : i32
    %c0_i32_0 = arith.constant 0 : i32
    %c0_i32_1 = arith.constant 0 : i32
    return %c0_i32, %c0_i32_0 : i32, i32
  }
  func.func @transform_5(%arg0: i32) -> (i32, i32) {
    %c0_i32 = arith.constant 0 : i32
    %c0_i32_0 = arith.constant 0 : i32
    %c0_i32_1 = arith.constant 0 : i32
    return %c0_i32, %c0_i32_0 : i32, i32
  }
  func.func @transform_6(%arg0: i32) -> (i32, i32) {
    %c0_i32 = arith.constant 0 : i32
    %c0_i32_0 = arith.constant 0 : i32
    %c0_i32_1 = arith.constant 0 : i32
    return %c0_i32, %c0_i32_0 : i32, i32
  }
  func.func @transform_7(%arg0: i32) -> (i32, i32) {
    %c0_i32 = arith.constant 0 : i32
    %c0_i32_0 = arith.constant 0 : i32
    %c0_i32_1 = arith.constant 0 : i32
    return %c0_i32, %c0_i32_0 : i32, i32
  }
  func.func @transform_8(%arg0: i32) -> (i32, i32) {
    %c0_i32 = arith.constant 0 : i32
    %c0_i32_0 = arith.constant 0 : i32
    %c0_i32_1 = arith.constant 0 : i32
    return %c0_i32, %c0_i32_0 : i32, i32
  }
  func.func @transform_9(%arg0: i32) -> (i32, i32) {
    %c0_i32 = arith.constant 0 : i32
    %c0_i32_0 = arith.constant 0 : i32
    %c0_i32_1 = arith.constant 0 : i32
    return %c0_i32, %c0_i32_0 : i32, i32
  }
  func.func @transform_10(%arg0: i32) -> (i32, i32) {
    %c0_i32 = arith.constant 0 : i32
    %c0_i32_0 = arith.constant 0 : i32
    %c0_i32_1 = arith.constant 0 : i32
    return %c0_i32, %c0_i32_0 : i32, i32
  }
  func.func @transform_11(%arg0: i32) -> (i32, i32) {
    %c0_i32 = arith.constant 0 : i32
    %c0_i32_0 = arith.constant 0 : i32
    return %arg0, %c0_i32 : i32, i32
  }
  func.func @transform_12(%arg0: i32) -> (i32, i32) {
    %c0_i32 = arith.constant 0 : i32
    %c0_i32_0 = arith.constant 0 : i32
    return %arg0, %c0_i32 : i32, i32
  }
  func.func @transform_13(%arg0: i32) -> (i32, i32, i32) {
    %c0_i32 = arith.constant 0 : i32
    %c0_i32_0 = arith.constant 0 : i32
    %c0_i32_1 = arith.constant 0 : i32
    return %arg0, %c0_i32, %c0_i32_0 : i32, i32, i32
  }
  func.func @transform_14(%arg0: i32) -> (i32, i32, i32) {
    %c0_i32 = arith.constant 0 : i32
    %c0_i32_0 = arith.constant 0 : i32
    %c0_i32_1 = arith.constant 0 : i32
    return %arg0, %c0_i32, %c0_i32_0 : i32, i32, i32
  }
}

</mosaic_0001>

<llo_original>
// kernel: tpu_custom_call.1
$region0: #{tpu_custom_call.1}
  #allocation0 [shape = 'u32[]', space=smem, size = 0x4, offset = 0x4, fixed_abs, tag = 'smem constant byte address 0x4 - core index']
  #allocation1 [shape = 'u32[144,128]{1,0:T(1,128)}', space=vmem, size = 0x12000, scoped, tag = 'internal scratch']
  %s0 = inlined_call_operand.hbm [shape: f32[8,128], index: 0, kind: input, shape index: {}]
  %s1 = inlined_call_operand.hbm [shape: bf16[128,128], index: 1, kind: input, shape index: {}]
  %s2 = inlined_call_operand.vmem [shape: f32[1,128], index: 2, kind: input, shape index: {}]
  %s3 = inlined_call_operand.hbm [shape: bf16[128,128], index: 3, kind: input, shape index: {}]
  %s4 = inlined_call_operand.vmem [shape: f32[1,128], index: 4, kind: input, shape index: {}]
  %s5 = inlined_call_operand.hbm [shape: f32[128,128], index: 5, kind: input, shape index: {}]
  %s6 = inlined_call_operand.vmem [shape: f32[1,128], index: 6, kind: input, shape index: {}]
  %s7 = inlined_call_operand.hbm [shape: bf16[128,128], index: 7, kind: input, shape index: {}]
  %s8 = inlined_call_operand.vmem [shape: f32[1,128], index: 8, kind: input, shape index: {}]
  %s9 = inlined_call_operand.hbm [shape: bf16[128,128], index: 9, kind: input, shape index: {}]
  %s10 = inlined_call_operand.vmem [shape: f32[1,128], index: 10, kind: input, shape index: {}]
  %s11 = inlined_call_operand.hbm [shape: f32[8,128], index: 11, kind: output, shape index: {0}]
  %s12 = inlined_call_operand.hbm [shape: f32[8,128], index: 12, kind: output, shape index: {1}]
  %s13 = inlined_call_operand.hbm [shape: f32[1,1,128], index: 13, kind: output, shape index: {2}]
  %s14 = inlined_call_operand.hbm [shape: f32[1,1,128], index: 14, kind: output, shape index: {3}]
  %15 = xla_tuple %s11, %s12, %s13, %s14
  %s16 = sld [smem:[#allocation0]]
  $region102: #{tpu_custom_call.1} parent=0
    _
  %s18 = ssub.s32 1, %s16
  %s19 = scalar_select 0, %s18, %s16
  $region1: #{tpu_custom_call.1} parent=0
    #allocation2 [shape = 'u8[4096]{0}', space=vmem, size = 0x1000, scoped, tag = 'input window, operand 0, single buffered']
    #allocation3 [shape = 's32[1]{0}', space=sflag, size = 0x4, scoped, tag = 'scoped memory for tpu_custom_call.1']
    #allocation4 [shape = 's32[1]{0}', space=sflag, size = 0x4, scoped, tag = 'scoped memory for tpu_custom_call.1']
    #allocation5 [shape = 'u8[32768]{0}', space=vmem, size = 0x8000, scoped, tag = 'input window, operand 1, single buffered']
    #allocation6 [shape = 's32[1]{0}', space=sflag, size = 0x4, scoped, tag = 'scoped memory for tpu_custom_call.1']
    #allocation7 [shape = 'u8[32768]{0}', space=vmem, size = 0x8000, scoped, tag = 'input window, operand 3, single buffered']
    #allocation8 [shape = 'u8[65536]{0}', space=vmem, size = 0x10000, scoped, tag = 'input window, operand 5, single buffered']
    #allocation9 [shape = 's32[1]{0}', space=sflag, size = 0x4, scoped, tag = 'scoped memory for tpu_custom_call.1']
    #allocation10 [shape = 'u8[32768]{0}', space=vmem, size = 0x8000, scoped, tag = 'input window, operand 7, single buffered']
    #allocation11 [shape = 'u8[32768]{0}', space=vmem, size = 0x8000, scoped, tag = 'input window, operand 9, single buffered']
    #allocation12 [shape = 's32[1]{0}', space=sflag, size = 0x4, scoped, tag = 'scoped memory for tpu_custom_call.1']
    #allocation13 [shape = 'u8[4096]{0}', space=vmem, size = 0x1000, scoped, tag = 'output window, operand 0, single buffered']
    #allocation14 [shape = 'u8[4096]{0}', space=vmem, size = 0x1000, scoped, tag = 'output window, operand 1, single buffered']
    #allocation15 [shape = 's32[1]{0}', space=sflag, size = 0x4, scoped, tag = 'scoped memory for tpu_custom_call.1']
    #allocation16 [shape = 'u8[512]{0}', space=vmem, size = 0x400, scoped, tag = 'output window, operand 2, single buffered']
    #allocation17 [shape = 'u8[512]{0}', space=vmem, size = 0x400, scoped, tag = 'output window, operand 3, single buffered']
    #allocation18 [shape = 's32[1]{0}', space=sflag, size = 0x4, scoped, tag = 'scoped memory for tpu_custom_call.1']
    %20 = vsyncpa [#allocation3], 0
    %21 = vsyncpa [#allocation6], 0
    %22 = vsyncpa [#allocation9], 0
    %23 = vsyncpa [#allocation12], 0
    %24 = vsyncpa [#allocation4], 0
    %25 = vsyncpa [#allocation15], 0
    %26 = vsyncpa [#allocation18], 0
    // Predicated region
    $region2: #{tpu_custom_call.1} parent=1 // pred_check
      _
    $region3: #{tpu_custom_call.1} parent=1 // pred_check_branch
      %28 = sbr.rel (0) target = $region5
    $region4: #{tpu_custom_call.1} parent=1 // pred_region
      %s30 = ssub.s32 128, 128
      %31 = vsyncadd [#allocation3], %s30
      %s33 = sshll.u32 [#allocation2], 4
      %s34 = int_to_ptr.vmem [resolvable:$true] %s33
      %36 = dma.hbm_to_vmem [thread:$0]  %s0, 128, %s34, [#allocation3]
    $region5: #{tpu_custom_call.1} parent=1 // pred_fallthru
      _
    // Predicated region
    $region6: #{tpu_custom_call.1} parent=1 // pred_check
      _
    $region7: #{tpu_custom_call.1} parent=1 // pred_check_branch
      %38 = sbr.rel (0) target = $region9
    $region8: #{tpu_custom_call.1} parent=1 // pred_region
      %s40 = ssub.s32 1024, 1024
      %41 = vsyncadd [#allocation6], %s40
      %s42 = sshll.u32 [#allocation5], 4
      %s43 = int_to_ptr.vmem [resolvable:$true] %s42
      %48 = dma.hbm_to_vmem [thread:$0]  %s1, 1024, %s43, [#allocation6], 64, 64, 4
    $region9: #{tpu_custom_call.1} parent=1 // pred_fallthru
      _
    // Predicated region
    $region10: #{tpu_custom_call.1} parent=1 // pred_check
      _
    $region11: #{tpu_custom_call.1} parent=1 // pred_check_branch
      %50 = sbr.rel (0) target = $region13
    $region12: #{tpu_custom_call.1} parent=1 // pred_region
      _
    $region13: #{tpu_custom_call.1} parent=1 // pred_fallthru
      _
    // Predicated region
    $region14: #{tpu_custom_call.1} parent=1 // pred_check
      _
    $region15: #{tpu_custom_call.1} parent=1 // pred_check_branch
      %52 = sbr.rel (0) target = $region17
    $region16: #{tpu_custom_call.1} parent=1 // pred_region
      %s54 = ssub.s32 1024, 1024
      %55 = vsyncadd [#allocation6], %s54
      %s56 = sshll.u32 [#allocation7], 4
      %s57 = int_to_ptr.vmem [resolvable:$true] %s56
      %62 = dma.hbm_to_vmem [thread:$0]  %s3, 1024, %s57, [#allocation6], 64, 64, 4
    $region17: #{tpu_custom_call.1} parent=1 // pred_fallthru
      _
    // Predicated region
    $region18: #{tpu_custom_call.1} parent=1 // pred_check
      _
    $region19: #{tpu_custom_call.1} parent=1 // pred_check_branch
      %64 = sbr.rel (0) target = $region21
    $region20: #{tpu_custom_call.1} parent=1 // pred_region
      _
    $region21: #{tpu_custom_call.1} parent=1 // pred_fallthru
      _
    // Predicated region
    $region22: #{tpu_custom_call.1} parent=1 // pred_check
      _
    $region23: #{tpu_custom_call.1} parent=1 // pred_check_branch
      %66 = sbr.rel (0) target = $region25
    $region24: #{tpu_custom_call.1} parent=1 // pred_region
      %s68 = ssub.s32 2048, 2048
      %69 = vsyncadd [#allocation9], %s68
      %s70 = sshll.u32 [#allocation8], 4
      %s71 = int_to_ptr.vmem [resolvable:$true] %s70
      %76 = dma.hbm_to_vmem [thread:$0]  %s5, 2048, %s71, [#allocation9], 128, 128, 8
    $region25: #{tpu_custom_call.1} parent=1 // pred_fallthru
      _
    // Predicated region
    $region26: #{tpu_custom_call.1} parent=1 // pred_check
      _
    $region27: #{tpu_custom_call.1} parent=1 // pred_check_branch
      %78 = sbr.rel (0) target = $region29
    $region28: #{tpu_custom_call.1} parent=1 // pred_region
      _
    $region29: #{tpu_custom_call.1} parent=1 // pred_fallthru
      _
    // Predicated region
    $region30: #{tpu_custom_call.1} parent=1 // pred_check
      _
    $region31: #{tpu_custom_call.1} parent=1 // pred_check_branch
      %80 = sbr.rel (0) target = $region33
    $region32: #{tpu_custom_call.1} parent=1 // pred_region
      %s82 = ssub.s32 1024, 1024
      %83 = vsyncadd [#allocation9], %s82
      %s84 = sshll.u32 [#allocation10], 4
      %s85 = int_to_ptr.vmem [resolvable:$true] %s84
      %90 = dma.hbm_to_vmem [thread:$0]  %s7, 1024, %s85, [#allocation9], 64, 64, 4
    $region33: #{tpu_custom_call.1} parent=1 // pred_fallthru
      _
    // Predicated region
    $region34: #{tpu_custom_call.1} parent=1 // pred_check
      _
    $region35: #{tpu_custom_call.1} parent=1 // pred_check_branch
      %92 = sbr.rel (0) target = $region37
    $region36: #{tpu_custom_call.1} parent=1 // pred_region
      _
    $region37: #{tpu_custom_call.1} parent=1 // pred_fallthru
      _
    // Predicated region
    $region38: #{tpu_custom_call.1} parent=1 // pred_check
      _
    $region39: #{tpu_custom_call.1} parent=1 // pred_check_branch
      %94 = sbr.rel (0) target = $region41
    $region40: #{tpu_custom_call.1} parent=1 // pred_region
      %s96 = ssub.s32 1024, 1024
      %97 = vsyncadd [#allocation12], %s96
      %s98 = sshll.u32 [#allocation11], 4
      %s99 = int_to_ptr.vmem [resolvable:$true] %s98
      %104 = dma.hbm_to_vmem [thread:$0]  %s9, 1024, %s99, [#allocation12], 64, 64, 4
    $region41: #{tpu_custom_call.1} parent=1 // pred_fallthru
      _
    // Predicated region
    $region42: #{tpu_custom_call.1} parent=1 // pred_check
      _
    $region43: #{tpu_custom_call.1} parent=1 // pred_check_branch
      %106 = sbr.rel (0) target = $region45
    $region44: #{tpu_custom_call.1} parent=1 // pred_region
      _
    $region45: #{tpu_custom_call.1} parent=1 // pred_fallthru
      _
    // Predicated region
    $region46: #{tpu_custom_call.1} parent=1 // pred_check
      _
    $region47: #{tpu_custom_call.1} parent=1 // pred_check_branch
      %108 = sbr.rel (0) target = $region49
    $region48: #{tpu_custom_call.1} parent=1 // pred_region
      %109 = dma.done [#allocation3], 128
    $region49: #{tpu_custom_call.1} parent=1 // pred_fallthru
      _
    // Predicated region
    $region50: #{tpu_custom_call.1} parent=1 // pred_check
      _
    $region51: #{tpu_custom_call.1} parent=1 // pred_check_branch
      %111 = sbr.rel (0) target = $region53
    $region52: #{tpu_custom_call.1} parent=1 // pred_region
      %112 = dma.done [#allocation6], 1024
    $region53: #{tpu_custom_call.1} parent=1 // pred_fallthru
      _
    // Predicated region
    $region54: #{tpu_custom_call.1} parent=1 // pred_check
      _
    $region55: #{tpu_custom_call.1} parent=1 // pred_check_branch
      %114 = sbr.rel (0) target = $region57
    $region56: #{tpu_custom_call.1} parent=1 // pred_region
      %115 = dma.done [#allocation6], 1024
    $region57: #{tpu_custom_call.1} parent=1 // pred_fallthru
      _
    // Predicated region
    $region58: #{tpu_custom_call.1} parent=1 // pred_check
      _
    $region59: #{tpu_custom_call.1} parent=1 // pred_check_branch
      %117 = sbr.rel (0) target = $region61
    $region60: #{tpu_custom_call.1} parent=1 // pred_region
      %118 = dma.done [#allocation9], 2048
    $region61: #{tpu_custom_call.1} parent=1 // pred_fallthru
      _
    // Predicated region
    $region62: #{tpu_custom_call.1} parent=1 // pred_check
      _
    $region63: #{tpu_custom_call.1} parent=1 // pred_check_branch
      %120 = sbr.rel (0) target = $region65
    $region64: #{tpu_custom_call.1} parent=1 // pred_region
      %121 = dma.done [#allocation9], 1024
    $region65: #{tpu_custom_call.1} parent=1 // pred_fallthru
      _
    // Predicated region
    $region66: #{tpu_custom_call.1} parent=1 // pred_check
      _
    $region67: #{tpu_custom_call.1} parent=1 // pred_check_branch
      %123 = sbr.rel (0) target = $region69
    $region68: #{tpu_custom_call.1} parent=1 // pred_region
      %124 = dma.done [#allocation12], 1024
    $region69: #{tpu_custom_call.1} parent=1 // pred_fallthru
      _
    %v126 = vld [vmem:[#allocation2] sm:$0xff]
    %v127 = vpack.c.bf16 %v126, %v126
    %v128 = vld [vmem:[#allocation5] sm:$0xf]
    %v129 = vld [vmem:[#allocation5 + $0x4] sm:$0xf]
    %v130 = vld [vmem:[#allocation5 + $0x8] sm:$0xf]
    %v131 = vld [vmem:[#allocation5 + $0xc] sm:$0xf]
    %v132 = vld [vmem:[#allocation5 + $0x10] sm:$0xf]
    %v133 = vld [vmem:[#allocation5 + $0x14] sm:$0xf]
    %v134 = vld [vmem:[#allocation5 + $0x18] sm:$0xf]
    %v135 = vld [vmem:[#allocation5 + $0x1c] sm:$0xf]
    %v136 = vld [vmem:[#allocation5 + $0x20] sm:$0xf]
    %v137 = vld [vmem:[#allocation5 + $0x24] sm:$0xf]
    %v138 = vld [vmem:[#allocation5 + $0x28] sm:$0xf]
    %v139 = vld [vmem:[#allocation5 + $0x2c] sm:$0xf]
    %v140 = vld [vmem:[#allocation5 + $0x30] sm:$0xf]
    %v141 = vld [vmem:[#allocation5 + $0x34] sm:$0xf]
    %v142 = vld [vmem:[#allocation5 + $0x38] sm:$0xf]
    %v143 = vld [vmem:[#allocation5 + $0x3c] sm:$0xf]
    %v144 = vld [vmem:[%s2] sm:$0x1]
    %v146 = vlaneseq
    %v147 = vshrl.u32 %v146, 7
    %v148 = vsub.s32 0, %v147
    %v149 = vrot.slane %v144, %v148
    %v167 = vunpack.c.l.b16 %v128
    %v168 = vunpack.c.l.b16 %v129
    %v169 = vunpack.c.l.b16 %v130
    %v170 = vunpack.c.l.b16 %v131
    %v171 = vunpack.c.l.b16 %v132
    %v172 = vunpack.c.l.b16 %v133
    %v173 = vunpack.c.l.b16 %v134
    %v174 = vunpack.c.l.b16 %v135
    %v175 = vunpack.c.l.b16 %v136
    %v176 = vunpack.c.l.b16 %v137
    %v177 = vunpack.c.l.b16 %v138
    %v178 = vunpack.c.l.b16 %v139
    %v179 = vunpack.c.l.b16 %v140
    %v180 = vunpack.c.l.b16 %v141
    %v181 = vunpack.c.l.b16 %v142
    %v182 = vunpack.c.l.b16 %v143
    %v183 = vpack.c.b16 %v168, %v167
    %v184 = vpack.c.b16 %v170, %v169
    %v185 = vpack.c.b16 %v172, %v171
    %v186 = vpack.c.b16 %v174, %v173
    %v187 = vpack.c.b16 %v176, %v175
    %v188 = vpack.c.b16 %v178, %v177
    %v189 = vpack.c.b16 %v180, %v179
    %v190 = vpack.c.b16 %v182, %v181
    %199 = vmatprep.subr.bf16.mxu0 0
    %200 = vmatpush1.bf16.msra.mxu0 %v183
    %201 = vmatprep.subr.bf16.mxu0 0
    %202 = vmatpush1.bf16.msra.mxu0 %v184
    %203 = vmatprep.subr.bf16.mxu0 0
    %204 = vmatpush1.bf16.msra.mxu0 %v185
    %205 = vmatprep.subr.bf16.mxu0 0
    %206 = vmatpush1.bf16.msra.mxu0 %v186
    %207 = vmatprep.subr.bf16.mxu0 0
    %208 = vmatpush1.bf16.msra.mxu0 %v187
    %209 = vmatprep.subr.bf16.mxu0 0
    %210 = vmatpush1.bf16.msra.mxu0 %v188
    %211 = vmatprep.subr.bf16.mxu0 0
    %212 = vmatpush1.bf16.msra.mxu0 %v189
    %213 = vmatprep.subr.bf16.mxu0 0
    %214 = vmatpush1.bf16.msra.mxu0 %v190
    %215 = vmatprep.subr.bf16.mxu0 0
    %216 = vmatpush1.bf16.msra.mxu0 0
    %217 = vmatprep.subr.bf16.mxu0 0
    %218 = vmatpush1.bf16.msra.mxu0 0
    %219 = vmatprep.subr.bf16.mxu0 0
    %220 = vmatpush1.bf16.msra.mxu0 0
    %221 = vmatprep.subr.bf16.mxu0 0
    %222 = vmatpush1.bf16.msra.mxu0 0
    %223 = vmatprep.subr.bf16.mxu0 0
    %224 = vmatpush1.bf16.msra.mxu0 0
    %225 = vmatprep.subr.bf16.mxu0 0
    %226 = vmatpush1.bf16.msra.mxu0 0
    %227 = vmatprep.subr.bf16.mxu0 0
    %228 = vmatpush1.bf16.msra.mxu0 0
    %229 = vmatprep.subr.bf16.mxu0 0
    %230 = vmatpush1.bf16.msra.mxu0 0
    %231 = vmatprep.mubr.bf16.mxu0 0
    %232 = vmatmul.mubr.bf16.gmra.mrb[0].mxu0 %v127
    %v233 = vpop.f32.mrb[0].mxu0
    %v234 = vadd.f32 %v149, %v233
    %v235 = vpop.f32.mrb[0].mxu0
    %v236 = vpop.f32.mrb[0].mxu0
    %v237 = vpop.f32.mrb[0].mxu0
    %238 = vdwg.mxu0
    %v239 = vmax.f32 %v234, 0.0
    %v240 = vpack.c.bf16 %v239, %v239
    %v241 = vld [vmem:[#allocation7] sm:$0xf]
    %v242 = vld [vmem:[#allocation7 + $0x4] sm:$0xf]
    %v243 = vld [vmem:[#allocation7 + $0x8] sm:$0xf]
    %v244 = vld [vmem:[#allocation7 + $0xc] sm:$0xf]
    %v245 = vld [vmem:[#allocation7 + $0x10] sm:$0xf]
    %v246 = vld [vmem:[#allocation7 + $0x14] sm:$0xf]
    %v247 = vld [vmem:[#allocation7 + $0x18] sm:$0xf]
    %v248 = vld [vmem:[#allocation7 + $0x1c] sm:$0xf]
    %v249 = vld [vmem:[#allocation7 + $0x20] sm:$0xf]
    %v250 = vld [vmem:[#allocation7 + $0x24] sm:$0xf]
    %v251 = vld [vmem:[#allocation7 + $0x28] sm:$0xf]
    %v252 = vld [vmem:[#allocation7 + $0x2c] sm:$0xf]
    %v253 = vld [vmem:[#allocation7 + $0x30] sm:$0xf]
    %v254 = vld [vmem:[#allocation7 + $0x34] sm:$0xf]
    %v255 = vld [vmem:[#allocation7 + $0x38] sm:$0xf]
    %v256 = vld [vmem:[#allocation7 + $0x3c] sm:$0xf]
    %v257 = vld [vmem:[%s4] sm:$0x1]
    %v259 = vlaneseq
    %v260 = vshrl.u32 %v259, 7
    %v261 = vsub.s32 0, %v260
    %v262 = vrot.slane %v257, %v261
    %v280 = vunpack.c.l.b16 %v241
    %v281 = vunpack.c.l.b16 %v242
    %v282 = vunpack.c.l.b16 %v243
    %v283 = vunpack.c.l.b16 %v244
    %v284 = vunpack.c.l.b16 %v245
    %v285 = vunpack.c.l.b16 %v246
    %v286 = vunpack.c.l.b16 %v247
    %v287 = vunpack.c.l.b16 %v248
    %v288 = vunpack.c.l.b16 %v249
    %v289 = vunpack.c.l.b16 %v250
    %v290 = vunpack.c.l.b16 %v251
    %v291 = vunpack.c.l.b16 %v252
    %v292 = vunpack.c.l.b16 %v253
    %v293 = vunpack.c.l.b16 %v254
    %v294 = vunpack.c.l.b16 %v255
    %v295 = vunpack.c.l.b16 %v256
    %v296 = vpack.c.b16 %v281, %v280
    %v297 = vpack.c.b16 %v283, %v282
    %v298 = vpack.c.b16 %v285, %v284
    %v299 = vpack.c.b16 %v287, %v286
    %v300 = vpack.c.b16 %v289, %v288
    %v301 = vpack.c.b16 %v291, %v290
    %v302 = vpack.c.b16 %v293, %v292
    %v303 = vpack.c.b16 %v295, %v294
    %312 = vmatprep.subr.bf16.mxu0 0
    %313 = vmatpush1.bf16.msra.mxu0 %v296
    %314 = vmatprep.subr.bf16.mxu0 0
    %315 = vmatpush1.bf16.msra.mxu0 %v297
    %316 = vmatprep.subr.bf16.mxu0 0
    %317 = vmatpush1.bf16.msra.mxu0 %v298
    %318 = vmatprep.subr.bf16.mxu0 0
    %319 = vmatpush1.bf16.msra.mxu0 %v299
    %320 = vmatprep.subr.bf16.mxu0 0
    %321 = vmatpush1.bf16.msra.mxu0 %v300
    %322 = vmatprep.subr.bf16.mxu0 0
    %323 = vmatpush1.bf16.msra.mxu0 %v301
    %324 = vmatprep.subr.bf16.mxu0 0
    %325 = vmatpush1.bf16.msra.mxu0 %v302
    %326 = vmatprep.subr.bf16.mxu0 0
    %327 = vmatpush1.bf16.msra.mxu0 %v303
    %328 = vmatprep.subr.bf16.mxu0 0
    %329 = vmatpush1.bf16.msra.mxu0 0
    %330 = vmatprep.subr.bf16.mxu0 0
    %331 = vmatpush1.bf16.msra.mxu0 0
    %332 = vmatprep.subr.bf16.mxu0 0
    %333 = vmatpush1.bf16.msra.mxu0 0
    %334 = vmatprep.subr.bf16.mxu0 0
    %335 = vmatpush1.bf16.msra.mxu0 0
    %336 = vmatprep.subr.bf16.mxu0 0
    %337 = vmatpush1.bf16.msra.mxu0 0
    %338 = vmatprep.subr.bf16.mxu0 0
    %339 = vmatpush1.bf16.msra.mxu0 0
    %340 = vmatprep.subr.bf16.mxu0 0
    %341 = vmatpush1.bf16.msra.mxu0 0
    %342 = vmatprep.subr.bf16.mxu0 0
    %343 = vmatpush1.bf16.msra.mxu0 0
    %344 = vmatprep.mubr.bf16.mxu0 0
    %345 = vmatmul.mubr.bf16.gmra.mrb[0].mxu0 %v240
    %v346 = vpop.f32.mrb[0].mxu0
    %v347 = vadd.f32 %v262, %v346
    %v348 = vpop.f32.mrb[0].mxu0
    %v349 = vpop.f32.mrb[0].mxu0
    %v350 = vpop.f32.mrb[0].mxu0
    %351 = vdwg.mxu0
    %352 = vst [vmem:[#allocation14] sm:$0xff] %v347
    %v353 = vld [vmem:[#allocation8] sm:$0xff]
    %v354 = vld [vmem:[#allocation8 + $0x8] sm:$0xff]
    %v355 = vld [vmem:[#allocation8 + $0x10] sm:$0xff]
    %v356 = vld [vmem:[#allocation8 + $0x18] sm:$0xff]
    %v357 = vld [vmem:[#allocation8 + $0x20] sm:$0xff]
    %v358 = vld [vmem:[#allocation8 + $0x28] sm:$0xff]
    %v359 = vld [vmem:[#allocation8 + $0x30] sm:$0xff]
    %v360 = vld [vmem:[#allocation8 + $0x38] sm:$0xff]
    %v361 = vld [vmem:[#allocation8 + $0x40] sm:$0xff]
    %v362 = vld [vmem:[#allocation8 + $0x48] sm:$0xff]
    %v363 = vld [vmem:[#allocation8 + $0x50] sm:$0xff]
    %v364 = vld [vmem:[#allocation8 + $0x58] sm:$0xff]
    %v365 = vld [vmem:[#allocation8 + $0x60] sm:$0xff]
    %v366 = vld [vmem:[#allocation8 + $0x68] sm:$0xff]
    %v367 = vld [vmem:[#allocation8 + $0x70] sm:$0xff]
    %v368 = vld [vmem:[#allocation8 + $0x78] sm:$0xff]
    %v369 = vmul.f32 %v347, %v347
    %370 = vadd.xlane.f32.xlu0 %v369
    %v371 = vpop.xlane.xlu0 %370
    %372 = vmatprep.subr.mxu0 0.0
    %373 = vmatpush1.xpose.msra.mxu0 %v353
    %374 = vmatprep.subr.mxu0 0.0
    %375 = vmatpush1.xpose.msra.mxu0 %v354
    %376 = vmatprep.subr.mxu0 0.0
    %377 = vmatpush1.xpose.msra.mxu0 %v355
    %378 = vmatprep.subr.mxu0 0.0
    %379 = vmatpush1.xpose.msra.mxu0 %v356
    %380 = vmatprep.subr.mxu0 0.0
    %381 = vmatpush1.xpose.msra.mxu0 %v357
    %382 = vmatprep.subr.mxu0 0.0
    %383 = vmatpush1.xpose.msra.mxu0 %v358
    %384 = vmatprep.subr.mxu0 0.0
    %385 = vmatpush1.xpose.msra.mxu0 %v359
    %386 = vmatprep.subr.mxu0 0.0
    %387 = vmatpush1.xpose.msra.mxu0 %v360
    %388 = vmatprep.subr.mxu0 0.0
    %389 = vmatpush1.xpose.msra.mxu0 %v361
    %390 = vmatprep.subr.mxu0 0.0
    %391 = vmatpush1.xpose.msra.mxu0 %v362
    %392 = vmatprep.subr.mxu0 0.0
    %393 = vmatpush1.xpose.msra.mxu0 %v363
    %394 = vmatprep.subr.mxu0 0.0
    %395 = vmatpush1.xpose.msra.mxu0 %v364
    %396 = vmatprep.subr.mxu0 0.0
    %397 = vmatpush1.xpose.msra.mxu0 %v365
    %398 = vmatprep.subr.mxu0 0.0
    %399 = vmatpush1.xpose.msra.mxu0 %v366
    %400 = vmatprep.subr.mxu0 0.0
    %401 = vmatpush1.xpose.msra.mxu0 %v367
    %402 = vmatprep.subr.mxu0 0.0
    %403 = vmatpush1.xpose.msra.mxu0 %v368
    %404 = vmatprep.subr.mxu0 0.0
    %405 = vmatpush1.xpose.msra.mxu0 0.0
    %406 = vmatprep.subr.mxu0 0.0
    %407 = vmatpush1.xpose.msra.mxu0 0.0
    %408 = vmatprep.subr.mxu0 0.0
    %409 = vmatpush1.xpose.msra.mxu0 0.0
    %410 = vmatprep.subr.mxu0 0.0
    %411 = vmatpush1.xpose.msra.mxu0 0.0
    %412 = vmatprep.subr.mxu0 0.0
    %413 = vmatpush1.xpose.msra.mxu0 0.0
    %414 = vmatprep.subr.mxu0 0.0
    %415 = vmatpush1.xpose.msra.mxu0 0.0
    %416 = vmatprep.subr.mxu0 0.0
    %417 = vmatpush1.xpose.msra.mxu0 0.0
    %418 = vmatprep.subr.mxu0 0.0
    %419 = vmatpush1.xpose.msra.mxu0 0.0
    %420 = vmatprep.subr.mxu0 0.0
    %421 = vmatpush1.xpose.msra.mxu0 0.0
    %422 = vmatprep.subr.mxu0 0.0
    %423 = vmatpush1.xpose.msra.mxu0 0.0
    %424 = vmatprep.subr.mxu0 0.0
    %425 = vmatpush1.xpose.msra.mxu0 0.0
    %426 = vmatprep.subr.mxu0 0.0
    %427 = vmatpush1.xpose.msra.mxu0 0.0
    %428 = vmatprep.subr.mxu0 0.0
    %429 = vmatpush1.xpose.msra.mxu0 0.0
    %430 = vmatprep.subr.mxu0 0.0
    %431 = vmatpush1.xpose.msra.mxu0 0.0
    %432 = vmatprep.subr.mxu0 0.0
    %433 = vmatpush1.xpose.msra.mxu0 0.0
    %434 = vmatprep.subr.mxu0 0.0
    %435 = vmatpush1.xpose.msra.mxu0 0.0
    %436 = vmatprep.mubr.f32.mxu0 0.0
    %437 = vmatmul.mubr.f32.gmra.mrb[0].mxu0 %v347
    %v438 = vpop.f32.mrb[0].mxu0
    %v439 = vadd.f32 0.0, %v438
    %v440 = vpop.f32.mrb[0].mxu0
    %441 = vdwg.mxu0
    %v442 = vld [vmem:[%s6] sm:$0x1]
    %v444 = vlaneseq
    %v445 = vshrl.u32 %v444, 7
    %v446 = vsub.s32 0, %v445
    %v447 = vrot.slane %v442, %v446
    %v449 = vadd.f32 %v371, %v447
    %v450 = vmul.f32 %v439, 2.0
    %v451 = vsub.f32 %v449, %v450
    %452 = vmin.xlane.f32.xlu0 %v451
    %v453 = vpop.xlane.xlu0 %452
    %v454 = vlaneseq
    %v455 = vand.u32 %v454, 127
    %vm456 = vcmp.eq.f32.partialorder %v451, %v453
    %v457 = vsel %vm456, %v455, 128
    %v458 = vand.u32 %v457, 65535
    %v459 = vshra.s32 %v457, 16
    %v460 = vcvt.s32.f32 %v458
    %v461 = vcvt.s32.f32 %v459
    %462 = vmin.xlane.f32.xlu0 %v461
    %v463 = vpop.xlane.xlu0 %462
    %vm464 = vcmp.eq.f32.partialorder %v461, %v463
    %v465 = vsel %vm464, %v460, inf
    %466 = vmin.xlane.f32.xlu0 %v465
    %v467 = vpop.xlane.xlu0 %466
    %v468 = vcvt.f32.s32 %v467
    %v469 = vcvt.f32.s32 %v463
    %v470 = vshll.u32 %v469, 16
    %v471 = vadd.s32 %v470, %v468
    %vm472 = vcmp.eq.s32.totalorder %v455, %v471
    %v473 = vsel %vm472, 1, 0
    %v474 = vcvt.s32.f32 %v473
    %475 = vmatprep.subr.mxu0 0.0
    %476 = vmatpush1.msra.mxu0 %v353
    %477 = vmatprep.subr.mxu0 0.0
    %478 = vmatpush1.msra.mxu0 %v354
    %479 = vmatprep.subr.mxu0 0.0
    %480 = vmatpush1.msra.mxu0 %v355
    %481 = vmatprep.subr.mxu0 0.0
    %482 = vmatpush1.msra.mxu0 %v356
    %483 = vmatprep.subr.mxu0 0.0
    %484 = vmatpush1.msra.mxu0 %v357
    %485 = vmatprep.subr.mxu0 0.0
    %486 = vmatpush1.msra.mxu0 %v358
    %487 = vmatprep.subr.mxu0 0.0
    %488 = vmatpush1.msra.mxu0 %v359
    %489 = vmatprep.subr.mxu0 0.0
    %490 = vmatpush1.msra.mxu0 %v360
    %491 = vmatprep.subr.mxu0 0.0
    %492 = vmatpush1.msra.mxu0 %v361
    %493 = vmatprep.subr.mxu0 0.0
    %494 = vmatpush1.msra.mxu0 %v362
    %495 = vmatprep.subr.mxu0 0.0
    %496 = vmatpush1.msra.mxu0 %v363
    %497 = vmatprep.subr.mxu0 0.0
    %498 = vmatpush1.msra.mxu0 %v364
    %499 = vmatprep.subr.mxu0 0.0
    %500 = vmatpush1.msra.mxu0 %v365
    %501 = vmatprep.subr.mxu0 0.0
    %502 = vmatpush1.msra.mxu0 %v366
    %503 = vmatprep.subr.mxu0 0.0
    %504 = vmatpush1.msra.mxu0 %v367
    %505 = vmatprep.subr.mxu0 0.0
    %506 = vmatpush1.msra.mxu0 %v368
    %507 = vmatprep.subr.mxu0 0.0
    %508 = vmatpush1.msra.mxu0 0.0
    %509 = vmatprep.subr.mxu0 0.0
    %510 = vmatpush1.msra.mxu0 0.0
    %511 = vmatprep.subr.mxu0 0.0
    %512 = vmatpush1.msra.mxu0 0.0
    %513 = vmatprep.subr.mxu0 0.0
    %514 = vmatpush1.msra.mxu0 0.0
    %515 = vmatprep.subr.mxu0 0.0
    %516 = vmatpush1.msra.mxu0 0.0
    %517 = vmatprep.subr.mxu0 0.0
    %518 = vmatpush1.msra.mxu0 0.0
    %519 = vmatprep.subr.mxu0 0.0
    %520 = vmatpush1.msra.mxu0 0.0
    %521 = vmatprep.subr.mxu0 0.0
    %522 = vmatpush1.msra.mxu0 0.0
    %523 = vmatprep.subr.mxu0 0.0
    %524 = vmatpush1.msra.mxu0 0.0
    %525 = vmatprep.subr.mxu0 0.0
    %526 = vmatpush1.msra.mxu0 0.0
    %527 = vmatprep.subr.mxu0 0.0
    %528 = vmatpush1.msra.mxu0 0.0
    %529 = vmatprep.subr.mxu0 0.0
    %530 = vmatpush1.msra.mxu0 0.0
    %531 = vmatprep.subr.mxu0 0.0
    %532 = vmatpush1.msra.mxu0 0.0
    %533 = vmatprep.subr.mxu0 0.0
    %534 = vmatpush1.msra.mxu0 0.0
    %535 = vmatprep.subr.mxu0 0.0
    %536 = vmatpush1.msra.mxu0 0.0
    %537 = vmatprep.subr.mxu0 0.0
    %538 = vmatpush1.msra.mxu0 0.0
    %539 = vmatprep.mubr.f32.mxu0 0.0
    %540 = vmatmul.mubr.f32.gmra.mrb[0].mxu0 %v474
    %v541 = vpop.f32.mrb[0].mxu0
    %v542 = vadd.f32 0.0, %v541
    %v543 = vpop.f32.mrb[0].mxu0
    %544 = vdwg.mxu0
    %v545 = vlaneseq
    %v546 = vshrl.u32 %v545, 7
    %s547 = smul.u32 0, 8
    %v548 = vstv %s547
    %v549 = vadd.s32 %v546, %v548
    %vm550 = vcmp.lt.s32.totalorder %v549, 8
    %v551 = vsel %vm550, 1, 0
    %v552 = vcvt.s32.f32 %v551
    %v553 = vsub.f32 %v542, %v347
    %v554 = vmul.f32 %v553, %v552
    %v555 = vmul.f32 %v554, %v554
    %556 = vadd.xlane.f32.xlu0 %v555
    %v557 = vpop.xlane.xlu0 %556
    %v558 = vrot.slane %v557, 4
    %v559 = vadd.f32 %v557, %v558
    %v560 = vrot.slane %v559, 2
    %v561 = vadd.f32 %v559, %v560
    %v562 = vrot.slane %v561, 1
    %v563 = vadd.f32 %v561, %v562
    %s564 = vtos %v563
    %v565 = vstv %s564
    %566 = vst [vmem:[#allocation16] sm:$0x1] %v565
    %v567 = vmul.f32 %v474, %v552
    %v568 = vrot.slane %v567, 4
    %v569 = vadd.f32 %v567, %v568
    %v570 = vrot.slane %v569, 2
    %v571 = vadd.f32 %v569, %v570
    %v572 = vrot.slane %v571, 1
    %v573 = vadd.f32 %v571, %v572
    %574 = vst [vmem:[#allocation17] sm:$0x1] %v573
    %v575 = vpack.c.bf16 %v542, %v542
    %v576 = vld [vmem:[#allocation10] sm:$0xf]
    %v577 = vld [vmem:[#allocation10 + $0x4] sm:$0xf]
    %v578 = vld [vmem:[#allocation10 + $0x8] sm:$0xf]
    %v579 = vld [vmem:[#allocation10 + $0xc] sm:$0xf]
    %v580 = vld [vmem:[#allocation10 + $0x10] sm:$0xf]
    %v581 = vld [vmem:[#allocation10 + $0x14] sm:$0xf]
    %v582 = vld [vmem:[#allocation10 + $0x18] sm:$0xf]
    %v583 = vld [vmem:[#allocation10 + $0x1c] sm:$0xf]
    %v584 = vld [vmem:[#allocation10 + $0x20] sm:$0xf]
    %v585 = vld [vmem:[#allocation10 + $0x24] sm:$0xf]
    %v586 = vld [vmem:[#allocation10 + $0x28] sm:$0xf]
    %v587 = vld [vmem:[#allocation10 + $0x2c] sm:$0xf]
    %v588 = vld [vmem:[#allocation10 + $0x30] sm:$0xf]
    %v589 = vld [vmem:[#allocation10 + $0x34] sm:$0xf]
    %v590 = vld [vmem:[#allocation10 + $0x38] sm:$0xf]
    %v591 = vld [vmem:[#allocation10 + $0x3c] sm:$0xf]
    %v592 = vld [vmem:[%s8] sm:$0x1]
    %v594 = vlaneseq
    %v595 = vshrl.u32 %v594, 7
    %v596 = vsub.s32 0, %v595
    %v597 = vrot.slane %v592, %v596
    %v615 = vunpack.c.l.b16 %v576
    %v616 = vunpack.c.l.b16 %v577
    %v617 = vunpack.c.l.b16 %v578
    %v618 = vunpack.c.l.b16 %v579
    %v619 = vunpack.c.l.b16 %v580
    %v620 = vunpack.c.l.b16 %v581
    %v621 = vunpack.c.l.b16 %v582
    %v622 = vunpack.c.l.b16 %v583
    %v623 = vunpack.c.l.b16 %v584
    %v624 = vunpack.c.l.b16 %v585
    %v625 = vunpack.c.l.b16 %v586
    %v626 = vunpack.c.l.b16 %v587
    %v627 = vunpack.c.l.b16 %v588
    %v628 = vunpack.c.l.b16 %v589
    %v629 = vunpack.c.l.b16 %v590
    %v630 = vunpack.c.l.b16 %v591
    %v631 = vpack.c.b16 %v616, %v615
    %v632 = vpack.c.b16 %v618, %v617
    %v633 = vpack.c.b16 %v620, %v619
    %v634 = vpack.c.b16 %v622, %v621
    %v635 = vpack.c.b16 %v624, %v623
    %v636 = vpack.c.b16 %v626, %v625
    %v637 = vpack.c.b16 %v628, %v627
    %v638 = vpack.c.b16 %v630, %v629
    %647 = vmatprep.subr.bf16.mxu0 0
    %648 = vmatpush1.bf16.msra.mxu0 %v631
    %649 = vmatprep.subr.bf16.mxu0 0
    %650 = vmatpush1.bf16.msra.mxu0 %v632
    %651 = vmatprep.subr.bf16.mxu0 0
    %652 = vmatpush1.bf16.msra.mxu0 %v633
    %653 = vmatprep.subr.bf16.mxu0 0
    %654 = vmatpush1.bf16.msra.mxu0 %v634
    %655 = vmatprep.subr.bf16.mxu0 0
    %656 = vmatpush1.bf16.msra.mxu0 %v635
    %657 = vmatprep.subr.bf16.mxu0 0
    %658 = vmatpush1.bf16.msra.mxu0 %v636
    %659 = vmatprep.subr.bf16.mxu0 0
    %660 = vmatpush1.bf16.msra.mxu0 %v637
    %661 = vmatprep.subr.bf16.mxu0 0
    %662 = vmatpush1.bf16.msra.mxu0 %v638
    %663 = vmatprep.subr.bf16.mxu0 0
    %664 = vmatpush1.bf16.msra.mxu0 0
    %665 = vmatprep.subr.bf16.mxu0 0
    %666 = vmatpush1.bf16.msra.mxu0 0
    %667 = vmatprep.subr.bf16.mxu0 0
    %668 = vmatpush1.bf16.msra.mxu0 0
    %669 = vmatprep.subr.bf16.mxu0 0
    %670 = vmatpush1.bf16.msra.mxu0 0
    %671 = vmatprep.subr.bf16.mxu0 0
    %672 = vmatpush1.bf16.msra.mxu0 0
    %673 = vmatprep.subr.bf16.mxu0 0
    %674 = vmatpush1.bf16.msra.mxu0 0
    %675 = vmatprep.subr.bf16.mxu0 0
    %676 = vmatpush1.bf16.msra.mxu0 0
    %677 = vmatprep.subr.bf16.mxu0 0
    %678 = vmatpush1.bf16.msra.mxu0 0
    %679 = vmatprep.mubr.bf16.mxu0 0
    %680 = vmatmul.mubr.bf16.gmra.mrb[0].mxu0 %v575
    %v681 = vpop.f32.mrb[0].mxu0
    %v682 = vadd.f32 %v597, %v681
    %v683 = vpop.f32.mrb[0].mxu0
    %v684 = vpop.f32.mrb[0].mxu0
    %v685 = vpop.f32.mrb[0].mxu0
    %686 = vdwg.mxu0
    %v687 = vmax.f32 %v682, 0.0
    %v688 = vpack.c.bf16 %v687, %v687
    %v689 = vld [vmem:[#allocation11] sm:$0xf]
    %v690 = vld [vmem:[#allocation11 + $0x4] sm:$0xf]
    %v691 = vld [vmem:[#allocation11 + $0x8] sm:$0xf]
    %v692 = vld [vmem:[#allocation11 + $0xc] sm:$0xf]
    %v693 = vld [vmem:[#allocation11 + $0x10] sm:$0xf]
    %v694 = vld [vmem:[#allocation11 + $0x14] sm:$0xf]
    %v695 = vld [vmem:[#allocation11 + $0x18] sm:$0xf]
    %v696 = vld [vmem:[#allocation11 + $0x1c] sm:$0xf]
    %v697 = vld [vmem:[#allocation11 + $0x20] sm:$0xf]
    %v698 = vld [vmem:[#allocation11 + $0x24] sm:$0xf]
    %v699 = vld [vmem:[#allocation11 + $0x28] sm:$0xf]
    %v700 = vld [vmem:[#allocation11 + $0x2c] sm:$0xf]
    %v701 = vld [vmem:[#allocation11 + $0x30] sm:$0xf]
    %v702 = vld [vmem:[#allocation11 + $0x34] sm:$0xf]
    %v703 = vld [vmem:[#allocation11 + $0x38] sm:$0xf]
    %v704 = vld [vmem:[#allocation11 + $0x3c] sm:$0xf]
    %v705 = vld [vmem:[%s10] sm:$0x1]
    %v707 = vlaneseq
    %v708 = vshrl.u32 %v707, 7
    %v709 = vsub.s32 0, %v708
    %v710 = vrot.slane %v705, %v709
    %v728 = vunpack.c.l.b16 %v689
    %v729 = vunpack.c.l.b16 %v690
    %v730 = vunpack.c.l.b16 %v691
    %v731 = vunpack.c.l.b16 %v692
    %v732 = vunpack.c.l.b16 %v693
    %v733 = vunpack.c.l.b16 %v694
    %v734 = vunpack.c.l.b16 %v695
    %v735 = vunpack.c.l.b16 %v696
    %v736 = vunpack.c.l.b16 %v697
    %v737 = vunpack.c.l.b16 %v698
    %v738 = vunpack.c.l.b16 %v699
    %v739 = vunpack.c.l.b16 %v700
    %v740 = vunpack.c.l.b16 %v701
    %v741 = vunpack.c.l.b16 %v702
    %v742 = vunpack.c.l.b16 %v703
    %v743 = vunpack.c.l.b16 %v704
    %v744 = vpack.c.b16 %v729, %v728
    %v745 = vpack.c.b16 %v731, %v730
    %v746 = vpack.c.b16 %v733, %v732
    %v747 = vpack.c.b16 %v735, %v734
    %v748 = vpack.c.b16 %v737, %v736
    %v749 = vpack.c.b16 %v739, %v738
    %v750 = vpack.c.b16 %v741, %v740
    %v751 = vpack.c.b16 %v743, %v742
    %760 = vmatprep.subr.bf16.mxu0 0
    %761 = vmatpush1.bf16.msra.mxu0 %v744
    %762 = vmatprep.subr.bf16.mxu0 0
    %763 = vmatpush1.bf16.msra.mxu0 %v745
    %764 = vmatprep.subr.bf16.mxu0 0
    %765 = vmatpush1.bf16.msra.mxu0 %v746
    %766 = vmatprep.subr.bf16.mxu0 0
    %767 = vmatpush1.bf16.msra.mxu0 %v747
    %768 = vmatprep.subr.bf16.mxu0 0
    %769 = vmatpush1.bf16.msra.mxu0 %v748
    %770 = vmatprep.subr.bf16.mxu0 0
    %771 = vmatpush1.bf16.msra.mxu0 %v749
    %772 = vmatprep.subr.bf16.mxu0 0
    %773 = vmatpush1.bf16.msra.mxu0 %v750
    %774 = vmatprep.subr.bf16.mxu0 0
    %775 = vmatpush1.bf16.msra.mxu0 %v751
    %776 = vmatprep.subr.bf16.mxu0 0
    %777 = vmatpush1.bf16.msra.mxu0 0
    %778 = vmatprep.subr.bf16.mxu0 0
    %779 = vmatpush1.bf16.msra.mxu0 0
    %780 = vmatprep.subr.bf16.mxu0 0
    %781 = vmatpush1.bf16.msra.mxu0 0
    %782 = vmatprep.subr.bf16.mxu0 0
    %783 = vmatpush1.bf16.msra.mxu0 0
    %784 = vmatprep.subr.bf16.mxu0 0
    %785 = vmatpush1.bf16.msra.mxu0 0
    %786 = vmatprep.subr.bf16.mxu0 0
    %787 = vmatpush1.bf16.msra.mxu0 0
    %788 = vmatprep.subr.bf16.mxu0 0
    %789 = vmatpush1.bf16.msra.mxu0 0
    %790 = vmatprep.subr.bf16.mxu0 0
    %791 = vmatpush1.bf16.msra.mxu0 0
    %792 = vmatprep.mubr.bf16.mxu0 0
    %793 = vmatmul.mubr.bf16.gmra.mrb[0].mxu0 %v688
    %v794 = vpop.f32.mrb[0].mxu0
    %v795 = vadd.f32 %v710, %v794
    %v796 = vpop.f32.mrb[0].mxu0
    %v797 = vpop.f32.mrb[0].mxu0
    %v798 = vpop.f32.mrb[0].mxu0
    %799 = vdwg.mxu0
    %800 = vst [vmem:[#allocation13] sm:$0xff] %v795
    // Predicated region
    $region70: #{tpu_custom_call.1} parent=1 // pred_check
      _
    $region71: #{tpu_custom_call.1} parent=1 // pred_check_branch
      %802 = sbr.rel (0) target = $region73
    $region72: #{tpu_custom_call.1} parent=1 // pred_region
      %s804 = ssub.s32 128, 128
      %805 = vsyncadd [#allocation4], %s804
      %s807 = sshll.u32 [#allocation13], 4
      %s808 = int_to_ptr.vmem [resolvable:$true] %s807
      %810 = dma.vmem_to_hbm [thread:$0]  %s808, 128, %s11, [#allocation4]
    $region73: #{tpu_custom_call.1} parent=1 // pred_fallthru
      _
    // Predicated region
    $region74: #{tpu_custom_call.1} parent=1 // pred_check
      _
    $region75: #{tpu_custom_call.1} parent=1 // pred_check_branch
      %812 = sbr.rel (0) target = $region77
    $region76: #{tpu_custom_call.1} parent=1 // pred_region
      %s814 = ssub.s32 128, 128
      %815 = vsyncadd [#allocation15], %s814
      %s817 = sshll.u32 [#allocation14], 4
      %s818 = int_to_ptr.vmem [resolvable:$true] %s817
      %820 = dma.vmem_to_hbm [thread:$0]  %s818, 128, %s12, [#allocation15]
    $region77: #{tpu_custom_call.1} parent=1 // pred_fallthru
      _
    // Predicated region
    $region78: #{tpu_custom_call.1} parent=1 // pred_check
      _
    $region79: #{tpu_custom_call.1} parent=1 // pred_check_branch
      %822 = sbr.rel (0) target = $region81
    $region80: #{tpu_custom_call.1} parent=1 // pred_region
      %s824 = ssub.s32 16, 16
      %825 = vsyncadd [#allocation15], %s824
      %s827 = sshll.u32 [#allocation16], 4
      %s828 = int_to_ptr.vmem [resolvable:$true] %s827
      %830 = dma.vmem_to_hbm [thread:$0]  %s828, 16, %s13, [#allocation15]
    $region81: #{tpu_custom_call.1} parent=1 // pred_fallthru
      _
    // Predicated region
    $region82: #{tpu_custom_call.1} parent=1 // pred_check
      _
    $region83: #{tpu_custom_call.1} parent=1 // pred_check_branch
      %832 = sbr.rel (0) target = $region85
    $region84: #{tpu_custom_call.1} parent=1 // pred_region
      %s834 = ssub.s32 16, 16
      %835 = vsyncadd [#allocation18], %s834
      %s837 = sshll.u32 [#allocation17], 4
      %s838 = int_to_ptr.vmem [resolvable:$true] %s837
      %840 = dma.vmem_to_hbm [thread:$0]  %s838, 16, %s14, [#allocation18]
    $region85: #{tpu_custom_call.1} parent=1 // pred_fallthru
      _
    // Predicated region
    $region86: #{tpu_custom_call.1} parent=1 // pred_check
      _
    $region87: #{tpu_custom_call.1} parent=1 // pred_check_branch
      %842 = sbr.rel (0) target = $region89
    $region88: #{tpu_custom_call.1} parent=1 // pred_region
      %843 = dma.done [#allocation4], 128
    $region89: #{tpu_custom_call.1} parent=1 // pred_fallthru
      _
    // Predicated region
    $region90: #{tpu_custom_call.1} parent=1 // pred_check
      _
    $region91: #{tpu_custom_call.1} parent=1 // pred_check_branch
      %845 = sbr.rel (0) target = $region93
    $region92: #{tpu_custom_call.1} parent=1 // pred_region
      %846 = dma.done [#allocation15], 128
    $region93: #{tpu_custom_call.1} parent=1 // pred_fallthru
      _
    // Predicated region
    $region94: #{tpu_custom_call.1} parent=1 // pred_check
      _
    $region95: #{tpu_custom_call.1} parent=1 // pred_check_branch
      %848 = sbr.rel (0) target = $region97
    $region96: #{tpu_custom_call.1} parent=1 // pred_region
      %849 = dma.done [#allocation15], 16
    $region97: #{tpu_custom_call.1} parent=1 // pred_fallthru
      _
    // Predicated region
    $region98: #{tpu_custom_call.1} parent=1 // pred_check
      _
    $region99: #{tpu_custom_call.1} parent=1 // pred_check_branch
      %851 = sbr.rel (0) target = $region101
    $region100: #{tpu_custom_call.1} parent=1 // pred_region
      %852 = dma.done [#allocation18], 16
    $region101: #{tpu_custom_call.1} parent=1 // pred_fallthru
      _
    %853 = vsyncpa [#allocation3], 1
    %854 = vsyncpa [#allocation6], 1
    %855 = vsyncpa [#allocation9], 1
    %856 = vsyncpa [#allocation12], 1
    %857 = vsyncpa [#allocation4], 1
    %858 = vsyncpa [#allocation15], 1
    %859 = vsyncpa [#allocation18], 1

</llo_original>
